<compile_context>
chip_gen: v6e
topology: v6e:2x2x1
jax: 0.10.0
libtpu: 0.0.40
codegen_flags: <defaults>
</compile_context>

<pallas_src>
import jax
import jax.numpy as jnp
from jax.experimental import pallas as pl
from jax.experimental.pallas import tpu as pltpu

S_DIM = 152
A_DIM = 76
HIDDEN = 30
H_PAD = 128        # hidden padded to a full lane group (clean K for the 2nd matmul)
A_PAD = 128        # gridded-path output padded to a full lane group (unmasked vst)
BATCH_TILE = 512   # max batch tile for the gridded path
SINGLE_SHOT_MAX = 256  # batches up to this size skip the grid entirely


def _round_up(n, m):
    return ((n + m - 1) // m) * m


def _mlp_block(x_ref, w1_ref, b1_ref, w2_ref, b2_ref):
    """Shared compute: bf16 operands on the MXU, f32 accumulate / bias / relu / tanh."""
    xb = x_ref[...].astype(jnp.bfloat16)            # f32 -> bf16 cast in VMEM
    h = jnp.dot(xb, w1_ref[...], preferred_element_type=jnp.float32)
    h = jnp.maximum(h + b1_ref[...], 0.0)           # bias + relu in f32 (VPU)
    y = jnp.dot(h.astype(jnp.bfloat16), w2_ref[...],
                preferred_element_type=jnp.float32)
    return jnp.tanh(y + b2_ref[...])                # bias f32, tanh on EUP


def actor_kernel_tiled(x_ref, w1_ref, b1_ref, w2_ref, b2_ref, o_ref):
    # Lane-dense (tb, 128) bf16 store; real 76 columns sliced outside the kernel.
    o_ref[...] = _mlp_block(x_ref, w1_ref, b1_ref, w2_ref, b2_ref).astype(o_ref.dtype)


def actor_kernel_single(x_ref, w1_ref, b1_ref, w2_ref, b2_ref, o_ref):
    # Tiny path: write the 76-lane output directly (masked vst, no external slice).
    y = _mlp_block(x_ref, w1_ref, b1_ref, w2_ref, b2_ref)
    o_ref[...] = y[:, :A_DIM].astype(o_ref.dtype)


def _cost_estimate(B, out_cols):
    # Advisory only — lets XLA schedule around this custom call.
    return pl.CostEstimate(
        flops=2 * B * (S_DIM * H_PAD + H_PAD * A_PAD),
        transcendentals=B * A_PAD,
        bytes_accessed=(B * S_DIM * 4            # x (f32, cast in-kernel)
                        + S_DIM * H_PAD * 2      # w1 (bf16)
                        + H_PAD * 4              # b1 (f32)
                        + H_PAD * A_PAD * 2      # w2 (bf16)
                        + A_PAD * 4              # b2 (f32)
                        + B * out_cols * 2),     # out (bf16)
    )


def prepare_params(w1, b1, w2, b2):
    """Zero-pad HIDDEN->128 and A_DIM->128, cast matmul operands to bf16.

    Inputs (nn.Linear weights already transposed):
      w1: (S_DIM, HIDDEN), b1: (1, HIDDEN), w2: (HIDDEN, A_DIM), b2: (1, A_DIM)
    Padded columns/rows are exactly zero so padding contributes nothing
    (h[:, 30:] == 0 and y[:, 76:] == tanh(0) == 0).
    """
    w1p = jnp.zeros((S_DIM, H_PAD), jnp.bfloat16).at[:, :HIDDEN].set(
        w1.astype(jnp.bfloat16))
    b1p = jnp.zeros((1, H_PAD), jnp.float32).at[:, :HIDDEN].set(
        b1.astype(jnp.float32))
    w2p = jnp.zeros((H_PAD, A_PAD), jnp.bfloat16).at[:HIDDEN, :A_DIM].set(
        w2.astype(jnp.bfloat16))
    b2p = jnp.zeros((1, A_PAD), jnp.float32).at[:, :A_DIM].set(
        b2.astype(jnp.float32))
    return w1p, b1p, w2p, b2p


def _choose_tile(B):
    """Batch tile: big (fatter DMAs), multiple of 16 (bf16 sublane packing),
    but capped so the grid has >= 2 steps (keeps both v7x TensorCores busy)."""
    tb = min(BATCH_TILE, _round_up(pl.cdiv(B, 2), 16))
    return max(tb, 16)


def actor_forward(x, w1p, b1p, w2p, b2p):
    """x: (B, S_DIM) float32. Returns (B, A_DIM) bfloat16."""
    B = x.shape[0]

    if B <= SINGLE_SHOT_MAX:
        # Tiny single-shot path: no grid, no pipelining machinery — every operand
        # lives whole in VMEM; 76-lane output written directly inside the kernel.
        vmem = pl.BlockSpec(memory_space=pltpu.MemorySpace.VMEM)
        return pl.pallas_call(
            actor_kernel_single,
            out_shape=jax.ShapeDtypeStruct((B, A_DIM), jnp.bfloat16),
            in_specs=[vmem] * 5,
            out_specs=vmem,
            cost_estimate=_cost_estimate(B, A_DIM),
        )(x, w1p, b1p, w2p, b2p)

    # Gridded path: weights stay resident (constant index_map), x/out tiles are
    # double-buffered, batch axis is megacore-parallel. cdiv grid handles any B;
    # the last partial block's out-of-range rows are write-masked by Pallas.
    tb = _choose_tile(B)
    out = pl.pallas_call(
        actor_kernel_tiled,
        out_shape=jax.ShapeDtypeStruct((B, A_PAD), jnp.bfloat16),
        grid=(pl.cdiv(B, tb),),
        in_specs=[
            pl.BlockSpec((tb, S_DIM), lambda i: (i, 0)),
            pl.BlockSpec((S_DIM, H_PAD), lambda i: (0, 0)),
            pl.BlockSpec((1, H_PAD), lambda i: (0, 0)),
            pl.BlockSpec((H_PAD, A_PAD), lambda i: (0, 0)),
            pl.BlockSpec((1, A_PAD), lambda i: (0, 0)),
        ],
        out_specs=pl.BlockSpec((tb, A_PAD), lambda i: (i, 0)),
        compiler_params=pltpu.CompilerParams(
            dimension_semantics=("parallel",)),
        cost_estimate=_cost_estimate(B, A_PAD),
    )(x, w1p, b1p, w2p, b2p)

    # Lane-dense (128-wide) store inside the kernel; slice to the real 76 outside.
    return out[:, :A_DIM]


def init_params(key):
    """Mirror ActorNet.__init__: weights ~ N(0, 0.1); biases ~ PyTorch default
    U(-1/sqrt(fan_in), 1/sqrt(fan_in)). Weights stored pre-transposed (in_f, out_f)."""
    k1, k2, k3, k4 = jax.random.split(key, 4)
    w1 = (0.1 * jax.random.normal(k1, (HIDDEN, S_DIM), jnp.float32)).T   # (S_DIM, 30)
    b1 = jax.random.uniform(k2, (1, HIDDEN), jnp.float32,
                            -1.0 / jnp.sqrt(S_DIM), 1.0 / jnp.sqrt(S_DIM))
    w2 = (0.1 * jax.random.normal(k3, (A_DIM, HIDDEN), jnp.float32)).T   # (30, A_DIM)
    b2 = jax.random.uniform(k4, (1, A_DIM), jnp.float32,
                            -1.0 / jnp.sqrt(HIDDEN), 1.0 / jnp.sqrt(HIDDEN))
    return w1, b1, w2, b2


def reference_forward_f32(x, w1, b1, w2, b2):
    h = jnp.maximum(x @ w1 + b1, 0.0)
    return jnp.tanh(h @ w2 + b2)


def reference_forward_bf16(x, w1, b1, w2, b2):
    """Pure-JAX reference matching the kernel's bf16-operand / f32-accumulate math."""
    h = jnp.dot(x.astype(jnp.bfloat16), w1.astype(jnp.bfloat16),
                preferred_element_type=jnp.float32)
    h = jnp.maximum(h + b1, 0.0)
    y = jnp.dot(h.astype(jnp.bfloat16), w2.astype(jnp.bfloat16),
                preferred_element_type=jnp.float32)
    return jnp.tanh(y + b2)


if __name__ == "__main__":
    key = jax.random.PRNGKey(0)
    kx, kp, kb = jax.random.split(key, 3)

    w1, b1, w2, b2 = init_params(kp)
    w1p, b1p, w2p, b2p = prepare_params(w1, b1, w2, b2)

    # 1) Small batch: single-shot, whole-in-VMEM path with direct 76-lane output.
    B = 8
    x = jax.random.normal(kx, (B, S_DIM), jnp.float32)
    out = jax.block_until_ready(actor_forward(x, w1p, b1p, w2p, b2p))
    assert out.shape == (B, A_DIM) and out.dtype == jnp.bfloat16

    ref_bf16 = reference_forward_bf16(x, w1, b1, w2, b2)
    err = float(jnp.max(jnp.abs(out.astype(jnp.float32) - ref_bf16)))
    assert err < 1e-2, err
    ref_f32 = reference_forward_f32(x, w1, b1, w2, b2)
    err_f32 = float(jnp.max(jnp.abs(out.astype(jnp.float32) - ref_f32)))
    assert err_f32 < 5e-2, err_f32

    # 2) Larger, non-divisible batch: cdiv-gridded, megacore-parallel path with a
    #    write-masked partial last block.
    B2 = 1000
    x2 = jax.random.normal(kb, (B2, S_DIM), jnp.float32)
    out2 = jax.block_until_ready(actor_forward(x2, w1p, b1p, w2p, b2p))
    assert out2.shape == (B2, A_DIM) and out2.dtype == jnp.bfloat16
    ref2 = reference_forward_bf16(x2, w1, b1, w2, b2)
    err2 = float(jnp.max(jnp.abs(out2.astype(jnp.float32) - ref2)))
    assert err2 < 1e-2, err2

    print("KERNEL_OK")
</pallas_src>

<mosaic_0001>
module attributes {stable_mosaic.version = 11 : i64} {
  func.func @actor_kernel_single(%arg0: memref<8x152xf32, #tpu.memory_space<vmem>>, %arg1: memref<152x128xbf16, #tpu.memory_space<vmem>>, %arg2: memref<1x128xf32, #tpu.memory_space<vmem>>, %arg3: memref<128x128xbf16, #tpu.memory_space<vmem>>, %arg4: memref<1x128xf32, #tpu.memory_space<vmem>>, %arg5: memref<8x76xbf16, #tpu.memory_space<vmem>>) attributes {dimension_semantics = [], scalar_prefetch = 0 : i64, scratch_operands = 0 : i64, tpu.core_type = #tpu.core_type<tc>} {
    %c0 = arith.constant 0 : index
    %c0_0 = arith.constant 0 : index
    %0 = vector.load %arg0[%c0, %c0_0] : memref<8x152xf32, #tpu.memory_space<vmem>>, vector<8x152xf32>
    %1 = arith.truncf %0 : vector<8x152xf32> to vector<8x152xbf16>
    %c0_1 = arith.constant 0 : index
    %c0_2 = arith.constant 0 : index
    %2 = vector.load %arg1[%c0_1, %c0_2] : memref<152x128xbf16, #tpu.memory_space<vmem>>, vector<152x128xbf16>
    %cst = arith.constant dense<0.000000e+00> : vector<8x128xf32>
    %3 = tpu.matmul %1, %2, %cst {dimension_numbers = #tpu.dot_dimension_numbers<[1], [0], [0], [1], [0, 0, 1, 1], [], []>} : vector<8x152xbf16>, vector<152x128xbf16>, vector<8x128xf32> -> vector<8x128xf32>
    %c0_3 = arith.constant 0 : index
    %c0_4 = arith.constant 0 : index
    %4 = vector.load %arg2[%c0_3, %c0_4] : memref<1x128xf32, #tpu.memory_space<vmem>>, vector<1x128xf32>
    %5 = vector.broadcast %4 : vector<1x128xf32> to vector<8x128xf32>
    %6 = arith.addf %3, %5 : vector<8x128xf32>
    %cst_5 = arith.constant 0.000000e+00 : f32
    %7 = vector.broadcast %cst_5 : f32 to vector<8x128xf32>
    %8 = arith.maximumf %6, %7 : vector<8x128xf32>
    %9 = arith.truncf %8 : vector<8x128xf32> to vector<8x128xbf16>
    %c0_6 = arith.constant 0 : index
    %c0_7 = arith.constant 0 : index
    %10 = vector.load %arg3[%c0_6, %c0_7] : memref<128x128xbf16, #tpu.memory_space<vmem>>, vector<128x128xbf16>
    %cst_8 = arith.constant dense<0.000000e+00> : vector<8x128xf32>
    %11 = tpu.matmul %9, %10, %cst_8 {dimension_numbers = #tpu.dot_dimension_numbers<[1], [0], [0], [1], [0, 0, 1, 1], [], []>} : vector<8x128xbf16>, vector<128x128xbf16>, vector<8x128xf32> -> vector<8x128xf32>
    %c0_9 = arith.constant 0 : index
    %c0_10 = arith.constant 0 : index
    %12 = vector.load %arg4[%c0_9, %c0_10] : memref<1x128xf32, #tpu.memory_space<vmem>>, vector<1x128xf32>
    %13 = vector.broadcast %12 : vector<1x128xf32> to vector<8x128xf32>
    %14 = arith.addf %11, %13 : vector<8x128xf32>
    %15 = math.tanh %14 : vector<8x128xf32>
    %16 = vector.extract_strided_slice %15 {offsets = [0, 0], sizes = [8, 76], strides = [1, 1]} : vector<8x128xf32> to vector<8x76xf32>
    %17 = arith.truncf %16 : vector<8x76xf32> to vector<8x76xbf16>
    %c0_11 = arith.constant 0 : index
    %c0_12 = arith.constant 0 : index
    %18 = vector.load %arg5[%c0_11, %c0_12] : memref<8x76xbf16, #tpu.memory_space<vmem>>, vector<8x76xbf16>
    tpu.vector_store %arg5[%c0_11, %c0_12], %17 {strides = array<i32>} : memref<8x76xbf16, #tpu.memory_space<vmem>>, vector<8x76xbf16>,
    return
  }
}

</mosaic_0001>

<llo_original>
// kernel: tpu_custom_call.1
$region0: #{tpu_custom_call.1}
  #allocation0 [shape = 'u32[]', space=smem, size = 0x4, offset = 0x4, fixed_abs, tag = 'smem constant byte address 0x4 - core index']
  #allocation1 [shape = 'u32[144,128]{1,0:T(1,128)}', space=vmem, size = 0x12000, scoped, tag = 'internal scratch']
  %s0 = inlined_call_operand.hbm [shape: f32[8,152], index: 0, kind: input, shape index: {}]
  %s1 = inlined_call_operand.hbm [shape: bf16[152,128], index: 1, kind: input, shape index: {}]
  %s2 = inlined_call_operand.vmem [shape: f32[1,128], index: 2, kind: input, shape index: {}]
  %s3 = inlined_call_operand.hbm [shape: bf16[128,128], index: 3, kind: input, shape index: {}]
  %s4 = inlined_call_operand.vmem [shape: f32[1,128], index: 4, kind: input, shape index: {}]
  %s5 = inlined_call_operand.hbm [shape: bf16[8,76], index: 5, kind: output, shape index: {}]
  %s6 = sld [smem:[#allocation0]]
  $region42: #{tpu_custom_call.1} parent=0
    _
  %s8 = ssub.s32 1, %s6
  %s9 = scalar_select 0, %s8, %s6
  $region1: #{tpu_custom_call.1} parent=0
    #allocation2 [shape = 'u8[8192]{0}', space=vmem, size = 0x2000, scoped, tag = 'input window, operand 0, single buffered']
    #allocation3 [shape = 's32[1]{0}', space=sflag, size = 0x4, scoped, tag = 'scoped memory for tpu_custom_call.1']
    #allocation4 [shape = 's32[1]{0}', space=sflag, size = 0x4, scoped, tag = 'scoped memory for tpu_custom_call.1']
    #allocation5 [shape = 'u8[38912]{0}', space=vmem, size = 0x9800, scoped, tag = 'input window, operand 1, single buffered']
    #allocation6 [shape = 's32[1]{0}', space=sflag, size = 0x4, scoped, tag = 'scoped memory for tpu_custom_call.1']
    #allocation7 [shape = 'u8[32768]{0}', space=vmem, size = 0x8000, scoped, tag = 'input window, operand 3, single buffered']
    #allocation8 [shape = 'u8[2048]{0}', space=vmem, size = 0x800, scoped, tag = 'output window, operand 0, single buffered']
    %10 = vsyncpa [#allocation3], 0
    %11 = vsyncpa [#allocation6], 0
    %12 = vsyncpa [#allocation4], 0
    // Predicated region
    $region2: #{tpu_custom_call.1} parent=1 // pred_check
      _
    $region3: #{tpu_custom_call.1} parent=1 // pred_check_branch
      %14 = sbr.rel (0) target = $region5
    $region4: #{tpu_custom_call.1} parent=1 // pred_region
      %s16 = ssub.s32 256, 256
      %17 = vsyncadd [#allocation3], %s16
      %s19 = sshll.u32 [#allocation2], 4
      %s20 = int_to_ptr.vmem [resolvable:$true] %s19
      %22 = dma.hbm_to_vmem [thread:$0]  %s0, 256, %s20, [#allocation3]
    $region5: #{tpu_custom_call.1} parent=1 // pred_fallthru
      _
    // Predicated region
    $region6: #{tpu_custom_call.1} parent=1 // pred_check
      _
    $region7: #{tpu_custom_call.1} parent=1 // pred_check_branch
      %24 = sbr.rel (0) target = $region9
    $region8: #{tpu_custom_call.1} parent=1 // pred_region
      %s26 = ssub.s32 1216, 1216
      %27 = vsyncadd [#allocation6], %s26
      %s28 = sshll.u32 [#allocation5], 4
      %s29 = int_to_ptr.vmem [resolvable:$true] %s28
      %34 = dma.hbm_to_vmem [thread:$0]  %s1, 1216, %s29, [#allocation6], 64, 64, 4
    $region9: #{tpu_custom_call.1} parent=1 // pred_fallthru
      _
    // Predicated region
    $region10: #{tpu_custom_call.1} parent=1 // pred_check
      _
    $region11: #{tpu_custom_call.1} parent=1 // pred_check_branch
      %36 = sbr.rel (0) target = $region13
    $region12: #{tpu_custom_call.1} parent=1 // pred_region
      _
    $region13: #{tpu_custom_call.1} parent=1 // pred_fallthru
      _
    // Predicated region
    $region14: #{tpu_custom_call.1} parent=1 // pred_check
      _
    $region15: #{tpu_custom_call.1} parent=1 // pred_check_branch
      %38 = sbr.rel (0) target = $region17
    $region16: #{tpu_custom_call.1} parent=1 // pred_region
      %s40 = ssub.s32 1024, 1024
      %41 = vsyncadd [#allocation6], %s40
      %s42 = sshll.u32 [#allocation7], 4
      %s43 = int_to_ptr.vmem [resolvable:$true] %s42
      %48 = dma.hbm_to_vmem [thread:$0]  %s3, 1024, %s43, [#allocation6], 64, 64, 4
    $region17: #{tpu_custom_call.1} parent=1 // pred_fallthru
      _
    // Predicated region
    $region18: #{tpu_custom_call.1} parent=1 // pred_check
      _
    $region19: #{tpu_custom_call.1} parent=1 // pred_check_branch
      %50 = sbr.rel (0) target = $region21
    $region20: #{tpu_custom_call.1} parent=1 // pred_region
      _
    $region21: #{tpu_custom_call.1} parent=1 // pred_fallthru
      _
    // Predicated region
    $region22: #{tpu_custom_call.1} parent=1 // pred_check
      _
    $region23: #{tpu_custom_call.1} parent=1 // pred_check_branch
      %52 = sbr.rel (0) target = $region25
    $region24: #{tpu_custom_call.1} parent=1 // pred_region
      %53 = dma.done [#allocation3], 256
    $region25: #{tpu_custom_call.1} parent=1 // pred_fallthru
      _
    // Predicated region
    $region26: #{tpu_custom_call.1} parent=1 // pred_check
      _
    $region27: #{tpu_custom_call.1} parent=1 // pred_check_branch
      %55 = sbr.rel (0) target = $region29
    $region28: #{tpu_custom_call.1} parent=1 // pred_region
      %56 = dma.done [#allocation6], 1216
    $region29: #{tpu_custom_call.1} parent=1 // pred_fallthru
      _
    // Predicated region
    $region30: #{tpu_custom_call.1} parent=1 // pred_check
      _
    $region31: #{tpu_custom_call.1} parent=1 // pred_check_branch
      %58 = sbr.rel (0) target = $region33
    $region32: #{tpu_custom_call.1} parent=1 // pred_region
      %59 = dma.done [#allocation6], 1024
    $region33: #{tpu_custom_call.1} parent=1 // pred_fallthru
      _
    %v61 = vld [vmem:[#allocation2] sm:$0xff]
    %v62 = vld [vmem:[#allocation2 + $0x8] sm:$0xff]
    %v63 = vpack.c.bf16 %v61, %v61
    %v64 = vpack.c.bf16 %v62, %v62
    %v65 = vld [vmem:[#allocation5] sm:$0xf]
    %v66 = vld [vmem:[#allocation5 + $0x4] sm:$0xf]
    %v67 = vld [vmem:[#allocation5 + $0x8] sm:$0xf]
    %v68 = vld [vmem:[#allocation5 + $0xc] sm:$0xf]
    %v69 = vld [vmem:[#allocation5 + $0x10] sm:$0xf]
    %v70 = vld [vmem:[#allocation5 + $0x14] sm:$0xf]
    %v71 = vld [vmem:[#allocation5 + $0x18] sm:$0xf]
    %v72 = vld [vmem:[#allocation5 + $0x1c] sm:$0xf]
    %v73 = vld [vmem:[#allocation5 + $0x20] sm:$0xf]
    %v74 = vld [vmem:[#allocation5 + $0x24] sm:$0xf]
    %v75 = vld [vmem:[#allocation5 + $0x28] sm:$0xf]
    %v76 = vld [vmem:[#allocation5 + $0x2c] sm:$0xf]
    %v77 = vld [vmem:[#allocation5 + $0x30] sm:$0xf]
    %v78 = vld [vmem:[#allocation5 + $0x34] sm:$0xf]
    %v79 = vld [vmem:[#allocation5 + $0x38] sm:$0xf]
    %v80 = vld [vmem:[#allocation5 + $0x3c] sm:$0xf]
    %v81 = vld [vmem:[#allocation5 + $0x40] sm:$0xf]
    %v82 = vld [vmem:[#allocation5 + $0x44] sm:$0xf]
    %v83 = vld [vmem:[#allocation5 + $0x48] sm:$0xf]
    %v84 = vld [vmem:[%s2] sm:$0x1]
    %v86 = vlaneseq
    %v87 = vshrl.u32 %v86, 7
    %v88 = vsub.s32 0, %v87
    %v89 = vrot.slane %v84, %v88
    %v110 = vunpack.c.l.b16 %v65
    %v111 = vunpack.c.l.b16 %v66
    %v112 = vunpack.c.l.b16 %v67
    %v113 = vunpack.c.l.b16 %v68
    %v114 = vunpack.c.l.b16 %v69
    %v115 = vunpack.c.l.b16 %v70
    %v116 = vunpack.c.l.b16 %v71
    %v117 = vunpack.c.l.b16 %v72
    %v118 = vunpack.c.l.b16 %v73
    %v119 = vunpack.c.l.b16 %v74
    %v120 = vunpack.c.l.b16 %v75
    %v121 = vunpack.c.l.b16 %v76
    %v122 = vunpack.c.l.b16 %v77
    %v123 = vunpack.c.l.b16 %v78
    %v124 = vunpack.c.l.b16 %v79
    %v125 = vunpack.c.l.b16 %v80
    %v126 = vunpack.c.l.b16 %v81
    %v127 = vunpack.c.l.b16 %v82
    %v128 = vunpack.c.l.b16 %v83
    %v129 = vpack.c.b16 %v111, %v110
    %v130 = vpack.c.b16 %v113, %v112
    %v131 = vpack.c.b16 %v115, %v114
    %v132 = vpack.c.b16 %v117, %v116
    %v133 = vpack.c.b16 %v119, %v118
    %v134 = vpack.c.b16 %v121, %v120
    %v135 = vpack.c.b16 %v123, %v122
    %v136 = vpack.c.b16 %v125, %v124
    %v137 = vpack.c.b16 %v127, %v126
    %v138 = vpack.c.b16 %v128, %v128
    %vm148 = vcmask 195584
    %v150 = vsel %vm148, %v64, 0
    %vm152 = vcmask 1043456
    %v154 = vsel %vm152, %v138, 0
    %156 = vmatprep.subr.bf16.mxu0 0
    %157 = vmatpush1.bf16.msra.mxu0 %v136
    %158 = vmatprep.subr.bf16.mxu0 0
    %159 = vmatpush1.bf16.msra.mxu0 %v135
    %160 = vmatprep.subr.bf16.mxu0 0
    %161 = vmatpush1.bf16.msra.mxu0 %v134
    %162 = vmatprep.subr.bf16.mxu0 0
    %163 = vmatpush1.bf16.msra.mxu0 %v133
    %164 = vmatprep.subr.bf16.mxu0 0
    %165 = vmatpush1.bf16.msra.mxu0 %v132
    %166 = vmatprep.subr.bf16.mxu0 0
    %167 = vmatpush1.bf16.msra.mxu0 %v131
    %168 = vmatprep.subr.bf16.mxu0 0
    %169 = vmatpush1.bf16.msra.mxu0 %v130
    %170 = vmatprep.subr.bf16.mxu0 0
    %171 = vmatpush1.bf16.msra.mxu0 %v129
    %172 = vmatprep.subr.bf16.mxu0 0
    %173 = vmatpush2.bf16.msra.mxu0 0
    %174 = vmatprep.subr.bf16.mxu0 0
    %175 = vmatpush2.bf16.msra.mxu0 0
    %176 = vmatprep.subr.bf16.mxu0 0
    %177 = vmatpush2.bf16.msra.mxu0 0
    %178 = vmatprep.subr.bf16.mxu0 0
    %179 = vmatpush2.bf16.msra.mxu0 0
    %180 = vmatprep.subr.bf16.mxu0 0
    %181 = vmatpush2.bf16.msra.mxu0 0
    %182 = vmatprep.subr.bf16.mxu0 0
    %183 = vmatpush2.bf16.msra.mxu0 0
    %184 = vmatprep.subr.bf16.mxu0 0
    %185 = vmatpush2.bf16.msra.mxu0 %v154
    %186 = vmatprep.subr.bf16.mxu0 0
    %187 = vmatpush2.bf16.msra.mxu0 %v137
    %188 = vmatprep.mubr.bf16.mxu0 %v150
    %189 = vmatmul.mubr.bf16.gmra.mxu0 %v63
    %v190 = vpop.f32.mrf.mxu0
    %v191 = vadd.f32 %v89, %v190
    %v192 = vpop.f32.mrf.mxu0
    %v193 = vpop.f32.mrf.mxu0
    %v194 = vpop.f32.mrf.mxu0
    %195 = vdwg.mxu0
    %v196 = vmax.f32 %v191, 0.0
    %v197 = vpack.c.bf16 %v196, %v196
    %v198 = vld [vmem:[#allocation7] sm:$0xf]
    %v199 = vld [vmem:[#allocation7 + $0x4] sm:$0xf]
    %v200 = vld [vmem:[#allocation7 + $0x8] sm:$0xf]
    %v201 = vld [vmem:[#allocation7 + $0xc] sm:$0xf]
    %v202 = vld [vmem:[#allocation7 + $0x10] sm:$0xf]
    %v203 = vld [vmem:[#allocation7 + $0x14] sm:$0xf]
    %v204 = vld [vmem:[#allocation7 + $0x18] sm:$0xf]
    %v205 = vld [vmem:[#allocation7 + $0x1c] sm:$0xf]
    %v206 = vld [vmem:[#allocation7 + $0x20] sm:$0xf]
    %v207 = vld [vmem:[#allocation7 + $0x24] sm:$0xf]
    %v208 = vld [vmem:[#allocation7 + $0x28] sm:$0xf]
    %v209 = vld [vmem:[#allocation7 + $0x2c] sm:$0xf]
    %v210 = vld [vmem:[#allocation7 + $0x30] sm:$0xf]
    %v211 = vld [vmem:[#allocation7 + $0x34] sm:$0xf]
    %v212 = vld [vmem:[#allocation7 + $0x38] sm:$0xf]
    %v213 = vld [vmem:[#allocation7 + $0x3c] sm:$0xf]
    %v214 = vld [vmem:[%s4] sm:$0x1]
    %v216 = vlaneseq
    %v217 = vshrl.u32 %v216, 7
    %v218 = vsub.s32 0, %v217
    %v219 = vrot.slane %v214, %v218
    %v237 = vunpack.c.l.b16 %v198
    %v238 = vunpack.c.l.b16 %v199
    %v239 = vunpack.c.l.b16 %v200
    %v240 = vunpack.c.l.b16 %v201
    %v241 = vunpack.c.l.b16 %v202
    %v242 = vunpack.c.l.b16 %v203
    %v243 = vunpack.c.l.b16 %v204
    %v244 = vunpack.c.l.b16 %v205
    %v245 = vunpack.c.l.b16 %v206
    %v246 = vunpack.c.l.b16 %v207
    %v247 = vunpack.c.l.b16 %v208
    %v248 = vunpack.c.l.b16 %v209
    %v249 = vunpack.c.l.b16 %v210
    %v250 = vunpack.c.l.b16 %v211
    %v251 = vunpack.c.l.b16 %v212
    %v252 = vunpack.c.l.b16 %v213
    %v253 = vpack.c.b16 %v238, %v237
    %v254 = vpack.c.b16 %v240, %v239
    %v255 = vpack.c.b16 %v242, %v241
    %v256 = vpack.c.b16 %v244, %v243
    %v257 = vpack.c.b16 %v246, %v245
    %v258 = vpack.c.b16 %v248, %v247
    %v259 = vpack.c.b16 %v250, %v249
    %v260 = vpack.c.b16 %v252, %v251
    %269 = vmatprep.subr.bf16.mxu0 0
    %270 = vmatpush1.bf16.msra.mxu0 %v260
    %271 = vmatprep.subr.bf16.mxu0 0
    %272 = vmatpush1.bf16.msra.mxu0 %v259
    %273 = vmatprep.subr.bf16.mxu0 0
    %274 = vmatpush1.bf16.msra.mxu0 %v258
    %275 = vmatprep.subr.bf16.mxu0 0
    %276 = vmatpush1.bf16.msra.mxu0 %v257
    %277 = vmatprep.subr.bf16.mxu0 0
    %278 = vmatpush1.bf16.msra.mxu0 %v256
    %279 = vmatprep.subr.bf16.mxu0 0
    %280 = vmatpush1.bf16.msra.mxu0 %v255
    %281 = vmatprep.subr.bf16.mxu0 0
    %282 = vmatpush1.bf16.msra.mxu0 %v254
    %283 = vmatprep.subr.bf16.mxu0 0
    %284 = vmatpush1.bf16.msra.mxu0 %v253
    %285 = vmatprep.subr.bf16.mxu0 0
    %286 = vmatpush2.bf16.msra.mxu0 0
    %287 = vmatprep.subr.bf16.mxu0 0
    %288 = vmatpush2.bf16.msra.mxu0 0
    %289 = vmatprep.subr.bf16.mxu0 0
    %290 = vmatpush2.bf16.msra.mxu0 0
    %291 = vmatprep.subr.bf16.mxu0 0
    %292 = vmatpush2.bf16.msra.mxu0 0
    %293 = vmatprep.subr.bf16.mxu0 0
    %294 = vmatpush2.bf16.msra.mxu0 0
    %295 = vmatprep.subr.bf16.mxu0 0
    %296 = vmatpush2.bf16.msra.mxu0 0
    %297 = vmatprep.subr.bf16.mxu0 0
    %298 = vmatpush2.bf16.msra.mxu0 0
    %299 = vmatprep.subr.bf16.mxu0 0
    %300 = vmatpush2.bf16.msra.mxu0 0
    %301 = vmatprep.mubr.bf16.mxu0 0
    %302 = vmatmul.mubr.bf16.gmra.mxu0 %v197
    %v303 = vpop.f32.mrf.mxu0
    %v304 = vadd.f32 %v219, %v303
    %v305 = vpop.f32.mrf.mxu0
    %v306 = vpop.f32.mrf.mxu0
    %v307 = vpop.f32.mrf.mxu0
    %308 = vdwg.mxu0
    %v309 = vtanh.pop %v304
    %v310 = vpack.c.bf16 %v309, %v309
    %vm311 = vcmask 617472
    %312 = vst.msk [vmem:[#allocation8] sm:$0xf] %vm311, %v310
    // Predicated region
    $region34: #{tpu_custom_call.1} parent=1 // pred_check
      _
    $region35: #{tpu_custom_call.1} parent=1 // pred_check_branch
      %314 = sbr.rel (0) target = $region37
    $region36: #{tpu_custom_call.1} parent=1 // pred_region
      %s316 = ssub.s32 64, 64
      %317 = vsyncadd [#allocation4], %s316
      %s319 = sshll.u32 [#allocation8], 4
      %s320 = int_to_ptr.vmem [resolvable:$true] %s319
      %322 = dma.vmem_to_hbm [thread:$0]  %s320, 64, %s5, [#allocation4]
    $region37: #{tpu_custom_call.1} parent=1 // pred_fallthru
      _
    // Predicated region
    $region38: #{tpu_custom_call.1} parent=1 // pred_check
      _
    $region39: #{tpu_custom_call.1} parent=1 // pred_check_branch
      %324 = sbr.rel (0) target = $region41
    $region40: #{tpu_custom_call.1} parent=1 // pred_region
      %325 = dma.done [#allocation4], 64
    $region41: #{tpu_custom_call.1} parent=1 // pred_fallthru
      _
    %326 = vsyncpa [#allocation3], 1
    %327 = vsyncpa [#allocation6], 1
    %328 = vsyncpa [#allocation4], 1

</llo_original>
